<compile_context>
chip_gen: v7x
topology: tpu7x:2x2x1
jax: 0.10.0
libtpu: 0.0.40
codegen_flags: <defaults>
</compile_context>

<pallas_src>
import functools
import math

import jax
import jax.numpy as jnp
from jax.experimental import pallas as pl
from jax.experimental.pallas import tpu as pltpu


def _dasoftsign_kernel(x_ref, p_ref, o_ref, *, smoothing):
    """One (TR, lane) tile.  p_ref rows (f32, resident across the grid):
       0: 0.5*(alpha_pos + alpha_neg)   1: 0.5*(alpha_pos - alpha_neg)
       2: weight                        3: bias
    """
    x = x_ref[...].astype(jnp.float32)       # (TR, lane)
    p = p_ref[...]                           # (4, lane)
    a_mean = p[0:1, :]
    a_hdiff = p[1:2, :]
    w = p[2:3, :]
    b = p[3:4, :]

    # sigmoid(s*x) = 0.5 + 0.5*tanh(0.5*s*x); the affine part of the sigmoid
    # is folded into a_mean/a_hdiff, so alpha = a_mean + a_hdiff * tanh(...).
    t = jnp.tanh((0.5 * smoothing) * x)
    alpha = a_mean + a_hdiff * t

    d = 1.0 + alpha * jnp.abs(x)
    # Approx EUP reciprocal + one Newton step (restores ~f32 accuracy) instead
    # of an exact f32 divide.
    r = pl.reciprocal(d, approx=True)
    r = r * (2.0 - d * r)
    out = x * r
    out = out * w + b
    o_ref[...] = out.astype(o_ref.dtype)


def dynamic_asymmetric_softsign(x, alpha_pos, alpha_neg, weight=None,
                                bias=None, smoothing=10.0):
    """x: (..., hidden); params: (hidden,). Returns same shape/dtype as x."""
    orig_shape = x.shape
    hidden = orig_shape[-1]
    rows = int(math.prod(orig_shape[:-1])) if len(orig_shape) > 1 else 1

    # elementwise_affine=False path: identity affine.
    if weight is None:
        weight = jnp.ones((hidden,), jnp.float32)
    if bias is None:
        bias = jnp.zeros((hidden,), jnp.float32)

    # ---- lane packing: fold k rows into the lane axis so blocks end on a
    # 128-lane boundary (unmasked stores).  Generalized via lcm(hidden, 128);
    # skipped (k=1) when rows don't divide k, so no padding copy is ever made.
    if hidden % 128 == 0:
        k = 1
    else:
        lcm = hidden * 128 // math.gcd(hidden, 128)
        k = lcm // hidden
        if rows % k != 0 or lcm > 4096:
            k = 1  # fallback: full-dim lane block (masked stores, but no pad)
    lane = hidden * k
    folded_rows = rows // k

    x2 = x.reshape(folded_rows, lane)   # contiguous reshape: no data movement

    # ---- per-feature params packed into one resident (4, lane) f32 block.
    def row(p):
        p = jnp.asarray(p, jnp.float32).reshape(hidden)
        return jnp.tile(p, (k,)) if k > 1 else p

    a_pos, a_neg = row(alpha_pos), row(alpha_neg)
    params = jnp.stack([0.5 * (a_pos + a_neg),
                        0.5 * (a_pos - a_neg),
                        row(weight), row(bias)], axis=0)

    # ---- row tiling: ~4 MiB input blocks (capped at 4096 rows), rounded to
    # the dtype's sublane multiple.  Ragged last block is masked by Pallas.
    itemsize = jnp.dtype(x.dtype).itemsize
    sub = {1: 32, 2: 16}.get(itemsize, 8)          # sublane multiple per dtype
    bytes_per_row = max(1, lane * itemsize)
    tr_target = (4 * 1024 * 1024) // bytes_per_row
    tr_target = max(sub, min(4096, (tr_target // sub) * sub))
    if folded_rows <= tr_target:
        if folded_rows >= 2 * sub:
            # keep >= 2 grid steps so v7x can shard rows across both TCs
            tr = (((folded_rows + 1) // 2 + sub - 1) // sub) * sub
        else:
            tr = folded_rows                       # full-dim block
    else:
        tr = tr_target
    grid = (pl.cdiv(folded_rows, tr),)

    kernel = functools.partial(_dasoftsign_kernel, smoothing=float(smoothing))

    out2 = pl.pallas_call(
        kernel,
        out_shape=jax.ShapeDtypeStruct((folded_rows, lane), x.dtype),
        grid_spec=pltpu.PrefetchScalarGridSpec(
            num_scalar_prefetch=0,
            grid=grid,
            in_specs=[
                pl.BlockSpec((tr, lane), lambda i: (i, 0)),
                pl.BlockSpec((4, lane), lambda i: (0, 0)),
            ],
            out_specs=pl.BlockSpec((tr, lane), lambda i: (i, 0)),
        ),
        compiler_params=pltpu.CompilerParams(
            dimension_semantics=("parallel",),
            vmem_limit_bytes=32 * 1024 * 1024),
    )(x2, params)

    return out2.reshape(orig_shape)


def _reference(x, alpha_pos, alpha_neg, weight, bias, smoothing=10.0):
    sig = jax.nn.sigmoid(smoothing * x)
    alpha = alpha_neg + (alpha_pos - alpha_neg) * sig
    out = x / (1.0 + alpha * jnp.abs(x))
    return out * weight + bias


if __name__ == "__main__":
    key = jax.random.PRNGKey(0)
    batch, seq, hidden = 2, 8, 32

    x = jax.random.normal(key, (batch, seq, hidden), dtype=jnp.float32)

    # Deterministic parameter init mirroring the PyTorch __init__.
    alpha_init_value = 0.5
    alpha_pos = jnp.ones((hidden,), jnp.float32) * alpha_init_value
    alpha_neg = jnp.ones((hidden,), jnp.float32) * alpha_init_value
    weight = jnp.ones((hidden,), jnp.float32)
    bias = jnp.zeros((hidden,), jnp.float32)
    # Perturb slightly (deterministically) so the asymmetric path is exercised.
    k1, k2, k3, k4 = jax.random.split(key, 4)
    alpha_pos = alpha_pos + 0.1 * jax.random.normal(k1, (hidden,), jnp.float32)
    alpha_neg = alpha_neg + 0.1 * jax.random.normal(k2, (hidden,), jnp.float32)
    weight = weight + 0.05 * jax.random.normal(k3, (hidden,), jnp.float32)
    bias = bias + 0.05 * jax.random.normal(k4, (hidden,), jnp.float32)

    out = dynamic_asymmetric_softsign(x, alpha_pos, alpha_neg, weight, bias,
                                      smoothing=10.0)
    out = jax.block_until_ready(out)

    ref = _reference(x, alpha_pos, alpha_neg, weight, bias, smoothing=10.0)
    assert out.shape == x.shape and out.dtype == x.dtype
    assert jnp.allclose(out, ref, atol=1e-5, rtol=1e-5), "mismatch vs reference"

    print("KERNEL_OK")
</pallas_src>

<mosaic_0001>
module attributes {stable_mosaic.version = 11 : i64} {
  func.func @_dasoftsign_kernel(%arg0: i32, %arg1: memref<4x128xf32, #tpu.memory_space<vmem>>, %arg2: memref<4x128xf32, #tpu.memory_space<vmem>>, %arg3: memref<4x128xf32, #tpu.memory_space<vmem>>) attributes {dimension_semantics = [#tpu.dimension_semantics<parallel>], iteration_bounds = array<i64: 1>, scalar_prefetch = 0 : i64, scratch_operands = 0 : i64, tpu.core_type = #tpu.core_type<tc>, window_params = [{transform_indices = @transform_0, window_bounds = array<i64: 4, 128>}, {pipeline_mode = #tpu.pipeline_mode<synchronous>, transform_indices = @transform_1, window_bounds = array<i64: 4, 128>}, {transform_indices = @transform_2, window_bounds = array<i64: 4, 128>}]} {
    %c0 = arith.constant 0 : index
    %c0_0 = arith.constant 0 : index
    %0 = vector.load %arg1[%c0, %c0_0] : memref<4x128xf32, #tpu.memory_space<vmem>>, vector<4x128xf32>
    %c0_1 = arith.constant 0 : index
    %c0_2 = arith.constant 0 : index
    %1 = vector.load %arg2[%c0_1, %c0_2] : memref<4x128xf32, #tpu.memory_space<vmem>>, vector<4x128xf32>
    %2 = vector.extract_strided_slice %1 {offsets = [0, 0], sizes = [1, 128], strides = [1, 1]} : vector<4x128xf32> to vector<1x128xf32>
    %3 = vector.extract_strided_slice %1 {offsets = [1, 0], sizes = [1, 128], strides = [1, 1]} : vector<4x128xf32> to vector<1x128xf32>
    %4 = vector.extract_strided_slice %1 {offsets = [2, 0], sizes = [1, 128], strides = [1, 1]} : vector<4x128xf32> to vector<1x128xf32>
    %5 = vector.extract_strided_slice %1 {offsets = [3, 0], sizes = [1, 128], strides = [1, 1]} : vector<4x128xf32> to vector<1x128xf32>
    %cst = arith.constant 5.000000e+00 : f32
    %6 = vector.broadcast %cst : f32 to vector<4x128xf32>
    %7 = arith.mulf %6, %0 : vector<4x128xf32>
    %8 = math.tanh %7 : vector<4x128xf32>
    %9 = vector.broadcast %3 : vector<1x128xf32> to vector<4x128xf32>
    %10 = arith.mulf %9, %8 : vector<4x128xf32>
    %11 = vector.broadcast %2 : vector<1x128xf32> to vector<4x128xf32>
    %12 = arith.addf %11, %10 : vector<4x128xf32>
    %13 = math.absf %0 : vector<4x128xf32>
    %14 = arith.mulf %12, %13 : vector<4x128xf32>
    %cst_3 = arith.constant 1.000000e+00 : f32
    %15 = vector.broadcast %cst_3 : f32 to vector<4x128xf32>
    %16 = arith.addf %15, %14 : vector<4x128xf32>
    %17 = tpu.reciprocal %16 {approx = true} : vector<4x128xf32> -> vector<4x128xf32>
    %18 = arith.mulf %16, %17 : vector<4x128xf32>
    %cst_4 = arith.constant 2.000000e+00 : f32
    %19 = vector.broadcast %cst_4 : f32 to vector<4x128xf32>
    %20 = arith.subf %19, %18 : vector<4x128xf32>
    %21 = arith.mulf %17, %20 : vector<4x128xf32>
    %22 = arith.mulf %0, %21 : vector<4x128xf32>
    %23 = vector.broadcast %4 : vector<1x128xf32> to vector<4x128xf32>
    %24 = arith.mulf %22, %23 : vector<4x128xf32>
    %25 = vector.broadcast %5 : vector<1x128xf32> to vector<4x128xf32>
    %26 = arith.addf %24, %25 : vector<4x128xf32>
    %c0_5 = arith.constant 0 : index
    %c0_6 = arith.constant 0 : index
    %27 = vector.load %arg3[%c0_5, %c0_6] : memref<4x128xf32, #tpu.memory_space<vmem>>, vector<4x128xf32>
    tpu.vector_store %arg3[%c0_5, %c0_6], %26 {strides = array<i32>} : memref<4x128xf32, #tpu.memory_space<vmem>>, vector<4x128xf32>,
    return
  }
  func.func @transform_0(%arg0: i32) -> (i32, i32) {
    %c0_i32 = arith.constant 0 : i32
    %c0_i32_0 = arith.constant 0 : i32
    return %arg0, %c0_i32 : i32, i32
  }
  func.func @transform_1(%arg0: i32) -> (i32, i32) {
    %c0_i32 = arith.constant 0 : i32
    %c0_i32_0 = arith.constant 0 : i32
    %c0_i32_1 = arith.constant 0 : i32
    return %c0_i32, %c0_i32_0 : i32, i32
  }
  func.func @transform_2(%arg0: i32) -> (i32, i32) {
    %c0_i32 = arith.constant 0 : i32
    %c0_i32_0 = arith.constant 0 : i32
    return %arg0, %c0_i32 : i32, i32
  }
}

</mosaic_0001>

<llo_original>
// kernel: tpu_custom_call.1
$region0: #{tpu_custom_call.1}
  #allocation0 [shape = 'u32[]', space=smem, size = 0x4, offset = 0x4, fixed_abs, tag = 'smem constant byte address 0x4 - core index']
  #allocation1 [shape = 'u32[144,128]{1,0:T(1,128)}', space=vmem, size = 0x12000, scoped, tag = 'internal scratch']
  %s0 = inlined_call_operand.hbm [shape: f32[4,128], index: 0, kind: input, shape index: {}]
  %s1 = inlined_call_operand.hbm [shape: f32[4,128], index: 1, kind: input, shape index: {}]
  %s2 = inlined_call_operand.hbm [shape: f32[4,128], index: 2, kind: output, shape index: {}]
  %s3 = sld [smem:[#allocation0]]
  $region26: #{tpu_custom_call.1} parent=0
    _
  %s5 = ssub.s32 1, %s3
  %s6 = scalar_select 0, %s5, %s3
  $region1: #{tpu_custom_call.1} parent=0
    #allocation2 [shape = 'u8[2048]{0}', space=vmem, size = 0x800, scoped, tag = 'input window, operand 0, single buffered']
    #allocation3 [shape = 's32[1]{0}', space=sflag, size = 0x4, scoped, tag = 'scoped memory for tpu_custom_call.1']
    #allocation4 [shape = 's32[1]{0}', space=sflag, size = 0x4, scoped, tag = 'scoped memory for tpu_custom_call.1']
    #allocation5 [shape = 'u8[2048]{0}', space=vmem, size = 0x800, scoped, tag = 'input window, operand 1, single buffered']
    #allocation6 [shape = 's32[1]{0}', space=sflag, size = 0x4, scoped, tag = 'scoped memory for tpu_custom_call.1']
    #allocation7 [shape = 'u8[2048]{0}', space=vmem, size = 0x800, scoped, tag = 'output window, operand 0, single buffered']
    %7 = vsyncpa [#allocation3], 0
    %8 = vsyncpa [#allocation6], 0
    %9 = vsyncpa [#allocation4], 0
    // Predicated region
    $region2: #{tpu_custom_call.1} parent=1 // pred_check
      _
    $region3: #{tpu_custom_call.1} parent=1 // pred_check_branch
      %11 = sbr.rel (0) target = $region5
    $region4: #{tpu_custom_call.1} parent=1 // pred_region
      %s13 = ssub.s32 64, 64
      %14 = vsyncadd [#allocation3], %s13
      %s16 = sshll.u32 [#allocation2], 4
      %s17 = int_to_ptr.vmem [resolvable:$true] %s16
      %19 = dma.hbm_to_vmem [thread:$0]  %s0, 64, %s17, [#allocation3]
    $region5: #{tpu_custom_call.1} parent=1 // pred_fallthru
      _
    // Predicated region
    $region6: #{tpu_custom_call.1} parent=1 // pred_check
      _
    $region7: #{tpu_custom_call.1} parent=1 // pred_check_branch
      %21 = sbr.rel (0) target = $region9
    $region8: #{tpu_custom_call.1} parent=1 // pred_region
      %s23 = ssub.s32 64, 64
      %24 = vsyncadd [#allocation6], %s23
      %s26 = sshll.u32 [#allocation5], 4
      %s27 = int_to_ptr.vmem [resolvable:$true] %s26
      %29 = dma.hbm_to_vmem [thread:$0]  %s1, 64, %s27, [#allocation6]
    $region9: #{tpu_custom_call.1} parent=1 // pred_fallthru
      _
    // Predicated region
    $region10: #{tpu_custom_call.1} parent=1 // pred_check
      _
    $region11: #{tpu_custom_call.1} parent=1 // pred_check_branch
      %31 = sbr.rel (0) target = $region13
    $region12: #{tpu_custom_call.1} parent=1 // pred_region
      %32 = dma.done [#allocation3], 64
    $region13: #{tpu_custom_call.1} parent=1 // pred_fallthru
      _
    // Predicated region
    $region14: #{tpu_custom_call.1} parent=1 // pred_check
      _
    $region15: #{tpu_custom_call.1} parent=1 // pred_check_branch
      %34 = sbr.rel (0) target = $region17
    $region16: #{tpu_custom_call.1} parent=1 // pred_region
      %35 = dma.done [#allocation6], 64
    $region17: #{tpu_custom_call.1} parent=1 // pred_fallthru
      _
    %v36 = vld [vmem:[#allocation2] sm:$0xf]
    %v37 = vld [vmem:[#allocation5] sm:$0xf]
    %v38 = vmul.f32 %v36, 5.0
    %v39 = vtanh.pop %v38
    %v40 = vlaneseq
    %v41 = vshrl.u32 %v40, 7
    %v42 = vsub.s32 1, %v41
    %v43 = vrot.slane %v37, %v42
    %v44 = vmul.f32 %v43, %v39
    %v45 = vlaneseq
    %v46 = vshrl.u32 %v45, 7
    %v47 = vsub.s32 0, %v46
    %v48 = vrot.slane %v37, %v47
    %v49 = vadd.f32 %v48, %v44
    %v50 = vand.u32 2147483647, %v36
    %v51 = vmul.f32 %v49, %v50
    %v52 = vadd.f32 %v51, 1.0
    %v53 = vrcp.pop %v52
    %v54 = vmul.f32 %v52, %v53
    %v55 = vsub.f32 2.0, %v54
    %v56 = vmul.f32 %v53, %v55
    %v57 = vmul.f32 %v36, %v56
    %v58 = vlaneseq
    %v59 = vshrl.u32 %v58, 7
    %v60 = vsub.s32 2, %v59
    %v61 = vrot.slane %v37, %v60
    %v62 = vmul.f32 %v57, %v61
    %v63 = vlaneseq
    %v64 = vshrl.u32 %v63, 7
    %v65 = vsub.s32 3, %v64
    %v66 = vrot.slane %v37, %v65
    %v67 = vadd.f32 %v62, %v66
    %68 = vst [vmem:[#allocation7] sm:$0xf] %v67
    // Predicated region
    $region18: #{tpu_custom_call.1} parent=1 // pred_check
      _
    $region19: #{tpu_custom_call.1} parent=1 // pred_check_branch
      %70 = sbr.rel (0) target = $region21
    $region20: #{tpu_custom_call.1} parent=1 // pred_region
      %s72 = ssub.s32 64, 64
      %73 = vsyncadd [#allocation4], %s72
      %s75 = sshll.u32 [#allocation7], 4
      %s76 = int_to_ptr.vmem [resolvable:$true] %s75
      %78 = dma.vmem_to_hbm [thread:$0]  %s76, 64, %s2, [#allocation4]
    $region21: #{tpu_custom_call.1} parent=1 // pred_fallthru
      _
    // Predicated region
    $region22: #{tpu_custom_call.1} parent=1 // pred_check
      _
    $region23: #{tpu_custom_call.1} parent=1 // pred_check_branch
      %80 = sbr.rel (0) target = $region25
    $region24: #{tpu_custom_call.1} parent=1 // pred_region
      %81 = dma.done [#allocation4], 64
    $region25: #{tpu_custom_call.1} parent=1 // pred_fallthru
      _
    %82 = vsyncpa [#allocation3], 1
    %83 = vsyncpa [#allocation6], 1
    %84 = vsyncpa [#allocation4], 1

</llo_original>
